<compile_context>
chip_gen: v5e
topology: v5e:2x2
jax: 0.10.0
libtpu: 0.0.40
codegen_flags: <defaults>
</compile_context>

<pallas_src>
import functools

import jax
import jax.numpy as jnp
from jax.experimental import pallas as pl
from jax.experimental.pallas import tpu as pltpu


def _round_up(x, m):
    return ((x + m - 1) // m) * m


def dgm_fused_kernel(cat_ref, s_ref, w_ref, b_ref, o_ref, *, tn):
    """One grid step: a (tb, K) activation tile against a (K, 3*tn) weight slab.

    cat_ref: (tb, K)      [x | s] batch tile, K = Din_p + Dout_p
    s_ref:   (tb, tn)     s columns of this N tile (for the gating epilogue)
    w_ref:   (K, 3*tn)    stacked [W_z | W_g | W_h] columns of this N tile
    b_ref:   (1, 3*tn)    stacked biases
    o_ref:   (tb, tn)     output tile
    """
    # Single fused MXU matmul -> (tb, 3*tn), f32 accumulation.
    zgh = jnp.dot(cat_ref[...], w_ref[...], preferred_element_type=jnp.float32)
    zgh = jnp.tanh(zgh + b_ref[...].astype(jnp.float32))

    z = zgh[:, 0 * tn:1 * tn]
    g = zgh[:, 1 * tn:2 * tn]
    h = zgh[:, 2 * tn:3 * tn]
    s = s_ref[...].astype(jnp.float32)

    o_ref[...] = ((1.0 - g) * h + z * s).astype(o_ref.dtype)


def dgm_layer_forward(x, s, params, *, tile_b=256):
    """x: (B, Din), s: (B, Dout). params: dict of transposed weights & biases."""
    B, Din = x.shape
    B2, Dout = s.shape
    assert B == B2, "x and s must share the batch dimension"

    f32 = jnp.float32

    # ---- padded / tiled shapes -------------------------------------------
    Din_p = _round_up(Din, 128)
    Dout_p = _round_up(Dout, 128)
    K = Din_p + Dout_p                       # fused contraction dim

    tb = min(tile_b, _round_up(B, 8))        # batch tile (multiple of 8)
    B_p = _round_up(B, tb)

    # N tile: largest of a few candidates that divides Dout_p and keeps one
    # weight buffer (K * 3*tn * 4B) under ~8 MiB (double-buffered -> ~16 MiB,
    # comfortably inside v7x's 64 MiB VMEM).
    tn = 128
    for cand in (512, 384, 256, 128):
        if cand <= Dout_p and Dout_p % cand == 0 and K * 3 * cand * 4 <= 8 * 1024 * 1024:
            tn = cand
            break
    num_n = Dout_p // tn
    num_b = B_p // tb

    # ---- wrapper-side packing (pure layout work) --------------------------
    def pad2(a, rows, cols):
        a = a.astype(f32)
        return jnp.pad(a, ((0, rows - a.shape[0]), (0, cols - a.shape[1])))

    x_p = pad2(x, B_p, Din_p)
    s_p = pad2(s, B_p, Dout_p)
    cat = jnp.concatenate([x_p, s_p], axis=1)                     # (B_p, K)

    def gate_w(u_key, w_key):
        # Stack the U* (Din, Dout) and the * (Dout, Dout) weights along K.
        return jnp.concatenate([pad2(params[u_key], Din_p, Dout_p),
                                pad2(params[w_key], Dout_p, Dout_p)], axis=0)

    # (K, 3, Dout_p) for the z / g / h gates; the r gate is dead code and omitted.
    W3 = jnp.stack([gate_w("w_uz", "w_z"),
                    gate_w("w_ug", "w_g"),
                    gate_w("w_uh", "w_h")], axis=1)
    # Regroup columns so each N tile sees a contiguous (K, 3*tn) slab.
    W3 = W3.reshape(K, 3, num_n, tn).transpose(0, 2, 1, 3).reshape(K, num_n * 3 * tn)

    b3 = jnp.stack([pad2(params["b_z"], 1, Dout_p),
                    pad2(params["b_g"], 1, Dout_p),
                    pad2(params["b_h"], 1, Dout_p)], axis=1)      # (1, 3, Dout_p)
    b3 = b3.reshape(1, 3, num_n, tn).transpose(0, 2, 1, 3).reshape(1, num_n * 3 * tn)

    kernel = functools.partial(dgm_fused_kernel, tn=tn)

    out_p = pl.pallas_call(
        kernel,
        out_shape=jax.ShapeDtypeStruct((B_p, Dout_p), s.dtype),
        grid=(num_n, num_b),                                      # N outer, batch inner
        in_specs=[
            # [x|s] batch tile: constant in n -> stays resident across the N sweep
            pl.BlockSpec((tb, K), lambda n, b: (b, 0)),
            # s columns for this N tile (gating epilogue)
            pl.BlockSpec((tb, tn), lambda n, b: (b, n)),
            # weight slab: constant in b -> streamed from HBM exactly once
            pl.BlockSpec((K, 3 * tn), lambda n, b: (0, n)),
            # fused bias row
            pl.BlockSpec((1, 3 * tn), lambda n, b: (0, n)),
        ],
        out_specs=pl.BlockSpec((tb, tn), lambda n, b: (b, n)),
        compiler_params=pltpu.CompilerParams(
            dimension_semantics=("parallel", "parallel"),
            vmem_limit_bytes=48 * 1024 * 1024,
        ),
    )(cat, s_p, W3, b3)

    return out_p[:B, :Dout]


def init_params(key, in_features, out_features, dtype=jnp.float32):
    """Deterministic synthetic parameters (shapes mirror the nn.Linear layers,
    stored transposed to (in, out) so the kernel computes x @ W directly)."""
    keys = jax.random.split(key, 12)
    p = {}
    # U* layers: Linear(in_features, out_features, bias=False)
    p["w_uz"] = jax.random.normal(keys[0], (in_features, out_features), dtype) * 0.1
    p["w_ug"] = jax.random.normal(keys[1], (in_features, out_features), dtype) * 0.1
    p["w_ur"] = jax.random.normal(keys[2], (in_features, out_features), dtype) * 0.1
    p["w_uh"] = jax.random.normal(keys[3], (in_features, out_features), dtype) * 0.1
    # Z/G/R/H layers: Linear(out_features, out_features)
    p["w_z"] = jax.random.normal(keys[4], (out_features, out_features), dtype) * 0.1
    p["w_g"] = jax.random.normal(keys[5], (out_features, out_features), dtype) * 0.1
    p["w_r"] = jax.random.normal(keys[6], (out_features, out_features), dtype) * 0.1
    p["w_h"] = jax.random.normal(keys[7], (out_features, out_features), dtype) * 0.1
    p["b_z"] = jax.random.normal(keys[8], (1, out_features), dtype) * 0.1
    p["b_g"] = jax.random.normal(keys[9], (1, out_features), dtype) * 0.1
    p["b_r"] = jax.random.normal(keys[10], (1, out_features), dtype) * 0.1
    p["b_h"] = jax.random.normal(keys[11], (1, out_features), dtype) * 0.1
    return p


def dgm_layer_ref(x, s, p):
    """Pure-JAX reference mirroring the PyTorch forward (r computed & unused)."""
    z = jnp.tanh(x @ p["w_uz"] + s @ p["w_z"] + p["b_z"])
    g = jnp.tanh(x @ p["w_ug"] + s @ p["w_g"] + p["b_g"])
    r = jnp.tanh(x @ p["w_ur"] + s @ p["w_r"] + p["b_r"])  # dead value, like the torch module
    h = jnp.tanh(x @ p["w_uh"] + s @ p["w_h"] + p["b_h"])
    return (1.0 - g) * h + z * s


if __name__ == "__main__":
    B, in_features, out_features = 8, 4, 32

    key = jax.random.PRNGKey(0)
    kx, ks, kp = jax.random.split(key, 3)
    x = jax.random.normal(kx, (B, in_features), jnp.float32)
    s = jax.random.normal(ks, (B, out_features), jnp.float32)
    params = init_params(kp, in_features, out_features)

    out = dgm_layer_forward(x, s, params)
    out = jax.block_until_ready(out)

    ref = dgm_layer_ref(x, s, params)
    assert out.shape == (B, out_features)
    assert jnp.allclose(out, ref, atol=2e-5, rtol=2e-5), "mismatch vs reference"

    print("KERNEL_OK")
</pallas_src>

<mosaic_0001>
module attributes {stable_mosaic.version = 11 : i64} {
  func.func @dgm_fused_kernel(%arg0: i32, %arg1: i32, %arg2: memref<8x256xf32, #tpu.memory_space<vmem>>, %arg3: memref<8x128xf32, #tpu.memory_space<vmem>>, %arg4: memref<256x384xf32, #tpu.memory_space<vmem>>, %arg5: memref<1x384xf32, #tpu.memory_space<vmem>>, %arg6: memref<8x128xf32, #tpu.memory_space<vmem>>) attributes {dimension_semantics = [#tpu.dimension_semantics<parallel>, #tpu.dimension_semantics<parallel>], iteration_bounds = array<i64: 1, 1>, scalar_prefetch = 0 : i64, scratch_operands = 0 : i64, tpu.core_type = #tpu.core_type<tc>, window_params = [{transform_indices = @transform_0, window_bounds = array<i64: 8, 256>}, {transform_indices = @transform_1, window_bounds = array<i64: 8, 128>}, {transform_indices = @transform_2, window_bounds = array<i64: 256, 384>}, {transform_indices = @transform_3, window_bounds = array<i64: 1, 384>}, {transform_indices = @transform_4, window_bounds = array<i64: 8, 128>}]} {
    %c0 = arith.constant 0 : index
    %c0_0 = arith.constant 0 : index
    %0 = vector.load %arg2[%c0, %c0_0] : memref<8x256xf32, #tpu.memory_space<vmem>>, vector<8x256xf32>
    %c0_1 = arith.constant 0 : index
    %c0_2 = arith.constant 0 : index
    %1 = vector.load %arg4[%c0_1, %c0_2] : memref<256x384xf32, #tpu.memory_space<vmem>>, vector<256x384xf32>
    %cst = arith.constant dense<0.000000e+00> : vector<8x384xf32>
    %2 = tpu.matmul %0, %1, %cst {dimension_numbers = #tpu.dot_dimension_numbers<[1], [0], [0], [1], [0, 0, 1, 1], [], []>} : vector<8x256xf32>, vector<256x384xf32>, vector<8x384xf32> -> vector<8x384xf32>
    %c0_3 = arith.constant 0 : index
    %c0_4 = arith.constant 0 : index
    %3 = vector.load %arg5[%c0_3, %c0_4] : memref<1x384xf32, #tpu.memory_space<vmem>>, vector<1x384xf32>
    %4 = vector.broadcast %3 : vector<1x384xf32> to vector<8x384xf32>
    %5 = arith.addf %2, %4 : vector<8x384xf32>
    %6 = math.tanh %5 : vector<8x384xf32>
    %7 = vector.extract_strided_slice %6 {offsets = [0, 0], sizes = [8, 128], strides = [1, 1]} : vector<8x384xf32> to vector<8x128xf32>
    %8 = vector.extract_strided_slice %6 {offsets = [0, 128], sizes = [8, 128], strides = [1, 1]} : vector<8x384xf32> to vector<8x128xf32>
    %9 = vector.extract_strided_slice %6 {offsets = [0, 256], sizes = [8, 128], strides = [1, 1]} : vector<8x384xf32> to vector<8x128xf32>
    %c0_5 = arith.constant 0 : index
    %c0_6 = arith.constant 0 : index
    %10 = vector.load %arg3[%c0_5, %c0_6] : memref<8x128xf32, #tpu.memory_space<vmem>>, vector<8x128xf32>
    %cst_7 = arith.constant 1.000000e+00 : f32
    %11 = vector.broadcast %cst_7 : f32 to vector<8x128xf32>
    %12 = arith.subf %11, %8 : vector<8x128xf32>
    %13 = arith.mulf %12, %9 : vector<8x128xf32>
    %14 = arith.mulf %7, %10 : vector<8x128xf32>
    %15 = arith.addf %13, %14 : vector<8x128xf32>
    %c0_8 = arith.constant 0 : index
    %c0_9 = arith.constant 0 : index
    %16 = vector.load %arg6[%c0_8, %c0_9] : memref<8x128xf32, #tpu.memory_space<vmem>>, vector<8x128xf32>
    tpu.vector_store %arg6[%c0_8, %c0_9], %15 {strides = array<i32>} : memref<8x128xf32, #tpu.memory_space<vmem>>, vector<8x128xf32>,
    return
  }
  func.func @transform_0(%arg0: i32, %arg1: i32) -> (i32, i32) {
    %c0_i32 = arith.constant 0 : i32
    %c0_i32_0 = arith.constant 0 : i32
    return %arg1, %c0_i32 : i32, i32
  }
  func.func @transform_1(%arg0: i32, %arg1: i32) -> (i32, i32) {
    %c0_i32 = arith.constant 0 : i32
    return %arg1, %arg0 : i32, i32
  }
  func.func @transform_2(%arg0: i32, %arg1: i32) -> (i32, i32) {
    %c0_i32 = arith.constant 0 : i32
    %c0_i32_0 = arith.constant 0 : i32
    return %c0_i32, %arg0 : i32, i32
  }
  func.func @transform_3(%arg0: i32, %arg1: i32) -> (i32, i32) {
    %c0_i32 = arith.constant 0 : i32
    %c0_i32_0 = arith.constant 0 : i32
    return %c0_i32, %arg0 : i32, i32
  }
  func.func @transform_4(%arg0: i32, %arg1: i32) -> (i32, i32) {
    %c0_i32 = arith.constant 0 : i32
    return %arg1, %arg0 : i32, i32
  }
}

</mosaic_0001>

<llo_original>
// kernel: tpu_custom_call.1
$region0: #{tpu_custom_call.1}
  #allocation0 [shape = 'u32[]', space=smem, size = 0x4, offset = 0x4, fixed_abs, tag = 'smem constant byte address 0x4 - core index']
  #allocation1 [shape = 'u32[72,128]{1,0:T(1,128)}', space=vmem, size = 0x9000, scoped, tag = 'internal scratch']
  %s0 = inlined_call_operand.hbm [shape: f32[8,256], index: 0, kind: input, shape index: {}]
  %s1 = inlined_call_operand.hbm [shape: f32[8,128], index: 1, kind: input, shape index: {}]
  %s2 = inlined_call_operand.hbm [shape: f32[256,384], index: 2, kind: input, shape index: {}]
  %s3 = inlined_call_operand.hbm [shape: f32[1,384], index: 3, kind: input, shape index: {}]
  %s4 = inlined_call_operand.hbm [shape: f32[8,128], index: 4, kind: output, shape index: {}]
  %s5 = sld [smem:[#allocation0]]
  $region42: #{tpu_custom_call.1} parent=0
    _
  %s7 = ssub.s32 1, %s5
  %s8 = scalar_select 0, %s7, %s5
  $region1: #{tpu_custom_call.1} parent=0
    #allocation2 [shape = 'u8[8192]{0}', space=vmem, size = 0x2000, scoped, tag = 'input window, operand 0, single buffered']
    #allocation3 [shape = 's32[1]{0}', space=sflag, size = 0x4, scoped, tag = 'scoped memory for tpu_custom_call.1']
    #allocation4 [shape = 's32[1]{0}', space=sflag, size = 0x4, scoped, tag = 'scoped memory for tpu_custom_call.1']
    #allocation5 [shape = 'u8[4096]{0}', space=vmem, size = 0x1000, scoped, tag = 'input window, operand 1, single buffered']
    #allocation6 [shape = 's32[1]{0}', space=sflag, size = 0x4, scoped, tag = 'scoped memory for tpu_custom_call.1']
    #allocation7 [shape = 'u8[393216]{0}', space=vmem, size = 0x60000, scoped, tag = 'input window, operand 2, single buffered']
    #allocation8 [shape = 'u8[1536]{0}', space=vmem, size = 0x800, scoped, tag = 'input window, operand 3, single buffered']
    #allocation9 [shape = 's32[1]{0}', space=sflag, size = 0x4, scoped, tag = 'scoped memory for tpu_custom_call.1']
    #allocation10 [shape = 'u8[4096]{0}', space=vmem, size = 0x1000, scoped, tag = 'output window, operand 0, single buffered']
    %9 = vsyncpa [#allocation3], 0
    %10 = vsyncpa [#allocation6], 0
    %11 = vsyncpa [#allocation9], 0
    %12 = vsyncpa [#allocation4], 0
    // Predicated region
    $region2: #{tpu_custom_call.1} parent=1 // pred_check
      _
    $region3: #{tpu_custom_call.1} parent=1 // pred_check_branch
      %14 = sbr.rel (0) target = $region5
    $region4: #{tpu_custom_call.1} parent=1 // pred_region
      %16 = vsyncadd [#allocation3], 0
      %s18 = sshll.u32 %s0, 4
      %s19 = int_to_ptr.hbm [resolvable:$true] %s18
      %s20 = sshll.u32 [#allocation2], 4
      %s21 = int_to_ptr.vmem [resolvable:$true] %s20
      %23 = dma.hbm_to_vmem [thread:$0]  %s19, 256, %s21, [#allocation3]
    $region5: #{tpu_custom_call.1} parent=1 // pred_fallthru
      _
    // Predicated region
    $region6: #{tpu_custom_call.1} parent=1 // pred_check
      _
    $region7: #{tpu_custom_call.1} parent=1 // pred_check_branch
      %25 = sbr.rel (0) target = $region9
    $region8: #{tpu_custom_call.1} parent=1 // pred_region
      %27 = vsyncadd [#allocation6], 0
      %s29 = sshll.u32 %s1, 4
      %s30 = int_to_ptr.hbm [resolvable:$true] %s29
      %s31 = sshll.u32 [#allocation5], 4
      %s32 = int_to_ptr.vmem [resolvable:$true] %s31
      %34 = dma.hbm_to_vmem [thread:$0]  %s30, 128, %s32, [#allocation6]
    $region9: #{tpu_custom_call.1} parent=1 // pred_fallthru
      _
    // Predicated region
    $region10: #{tpu_custom_call.1} parent=1 // pred_check
      _
    $region11: #{tpu_custom_call.1} parent=1 // pred_check_branch
      %36 = sbr.rel (0) target = $region13
    $region12: #{tpu_custom_call.1} parent=1 // pred_region
      %38 = vsyncadd [#allocation6], 0
      %s39 = sshll.u32 %s2, 4
      %s40 = int_to_ptr.hbm [resolvable:$true] %s39
      %s41 = sshll.u32 [#allocation7], 4
      %s42 = int_to_ptr.vmem [resolvable:$true] %s41
      %47 = dma.hbm_to_vmem [thread:$0]  %s40, 12288, %s42, [#allocation6], 384, 384, 24
    $region13: #{tpu_custom_call.1} parent=1 // pred_fallthru
      _
    // Predicated region
    $region14: #{tpu_custom_call.1} parent=1 // pred_check
      _
    $region15: #{tpu_custom_call.1} parent=1 // pred_check_branch
      %49 = sbr.rel (0) target = $region17
    $region16: #{tpu_custom_call.1} parent=1 // pred_region
      %51 = vsyncadd [#allocation9], 0
      %s53 = sshll.u32 %s3, 4
      %s54 = int_to_ptr.hbm [resolvable:$true] %s53
      %s55 = sshll.u32 [#allocation8], 4
      %s56 = int_to_ptr.vmem [resolvable:$true] %s55
      %58 = dma.hbm_to_vmem [thread:$0]  %s54, 48, %s56, [#allocation9]
    $region17: #{tpu_custom_call.1} parent=1 // pred_fallthru
      _
    // Predicated region
    $region18: #{tpu_custom_call.1} parent=1 // pred_check
      _
    $region19: #{tpu_custom_call.1} parent=1 // pred_check_branch
      %60 = sbr.rel (0) target = $region21
    $region20: #{tpu_custom_call.1} parent=1 // pred_region
      %62 = dma.done [#allocation3], 256
    $region21: #{tpu_custom_call.1} parent=1 // pred_fallthru
      _
    // Predicated region
    $region22: #{tpu_custom_call.1} parent=1 // pred_check
      _
    $region23: #{tpu_custom_call.1} parent=1 // pred_check_branch
      %64 = sbr.rel (0) target = $region25
    $region24: #{tpu_custom_call.1} parent=1 // pred_region
      %66 = dma.done [#allocation6], 128
    $region25: #{tpu_custom_call.1} parent=1 // pred_fallthru
      _
    // Predicated region
    $region26: #{tpu_custom_call.1} parent=1 // pred_check
      _
    $region27: #{tpu_custom_call.1} parent=1 // pred_check_branch
      %68 = sbr.rel (0) target = $region29
    $region28: #{tpu_custom_call.1} parent=1 // pred_region
      %70 = dma.done [#allocation6], 12288
    $region29: #{tpu_custom_call.1} parent=1 // pred_fallthru
      _
    // Predicated region
    $region30: #{tpu_custom_call.1} parent=1 // pred_check
      _
    $region31: #{tpu_custom_call.1} parent=1 // pred_check_branch
      %72 = sbr.rel (0) target = $region33
    $region32: #{tpu_custom_call.1} parent=1 // pred_region
      %74 = dma.done [#allocation9], 48
    $region33: #{tpu_custom_call.1} parent=1 // pred_fallthru
      _
    %v75 = vld [vmem:[#allocation2] sm:$0xff]
    %v76 = vld [vmem:[#allocation2 + $0x8] sm:$0xff]
    %v77 = vld [vmem:[#allocation7] sm:$0xff]
    %v78 = vld [vmem:[#allocation7 + $0x8] sm:$0xff]
    %v79 = vld [vmem:[#allocation7 + $0x10] sm:$0xff]
    %v80 = vld [vmem:[#allocation7 + $0x18] sm:$0xff]
    %v81 = vld [vmem:[#allocation7 + $0x20] sm:$0xff]
    %v82 = vld [vmem:[#allocation7 + $0x28] sm:$0xff]
    %v83 = vld [vmem:[#allocation7 + $0x30] sm:$0xff]
    %v84 = vld [vmem:[#allocation7 + $0x38] sm:$0xff]
    %v85 = vld [vmem:[#allocation7 + $0x40] sm:$0xff]
    %v86 = vld [vmem:[#allocation7 + $0x48] sm:$0xff]
    %v87 = vld [vmem:[#allocation7 + $0x50] sm:$0xff]
    %v88 = vld [vmem:[#allocation7 + $0x58] sm:$0xff]
    %v89 = vld [vmem:[#allocation7 + $0x60] sm:$0xff]
    %v90 = vld [vmem:[#allocation7 + $0x68] sm:$0xff]
    %v91 = vld [vmem:[#allocation7 + $0x70] sm:$0xff]
    %v92 = vld [vmem:[#allocation7 + $0x78] sm:$0xff]
    %v93 = vld [vmem:[#allocation7 + $0x80] sm:$0xff]
    %v94 = vld [vmem:[#allocation7 + $0x88] sm:$0xff]
    %v95 = vld [vmem:[#allocation7 + $0x90] sm:$0xff]
    %v96 = vld [vmem:[#allocation7 + $0x98] sm:$0xff]
    %v97 = vld [vmem:[#allocation7 + $0xa0] sm:$0xff]
    %v98 = vld [vmem:[#allocation7 + $0xa8] sm:$0xff]
    %v99 = vld [vmem:[#allocation7 + $0xb0] sm:$0xff]
    %v100 = vld [vmem:[#allocation7 + $0xb8] sm:$0xff]
    %v101 = vld [vmem:[#allocation7 + $0xc0] sm:$0xff]
    %v102 = vld [vmem:[#allocation7 + $0xc8] sm:$0xff]
    %v103 = vld [vmem:[#allocation7 + $0xd0] sm:$0xff]
    %v104 = vld [vmem:[#allocation7 + $0xd8] sm:$0xff]
    %v105 = vld [vmem:[#allocation7 + $0xe0] sm:$0xff]
    %v106 = vld [vmem:[#allocation7 + $0xe8] sm:$0xff]
    %v107 = vld [vmem:[#allocation7 + $0xf0] sm:$0xff]
    %v108 = vld [vmem:[#allocation7 + $0xf8] sm:$0xff]
    %v109 = vld [vmem:[#allocation7 + $0x100] sm:$0xff]
    %v110 = vld [vmem:[#allocation7 + $0x108] sm:$0xff]
    %v111 = vld [vmem:[#allocation7 + $0x110] sm:$0xff]
    %v112 = vld [vmem:[#allocation7 + $0x118] sm:$0xff]
    %v113 = vld [vmem:[#allocation7 + $0x120] sm:$0xff]
    %v114 = vld [vmem:[#allocation7 + $0x128] sm:$0xff]
    %v115 = vld [vmem:[#allocation7 + $0x130] sm:$0xff]
    %v116 = vld [vmem:[#allocation7 + $0x138] sm:$0xff]
    %v117 = vld [vmem:[#allocation7 + $0x140] sm:$0xff]
    %v118 = vld [vmem:[#allocation7 + $0x148] sm:$0xff]
    %v119 = vld [vmem:[#allocation7 + $0x150] sm:$0xff]
    %v120 = vld [vmem:[#allocation7 + $0x158] sm:$0xff]
    %v121 = vld [vmem:[#allocation7 + $0x160] sm:$0xff]
    %v122 = vld [vmem:[#allocation7 + $0x168] sm:$0xff]
    %v123 = vld [vmem:[#allocation7 + $0x170] sm:$0xff]
    %v124 = vld [vmem:[#allocation7 + $0x178] sm:$0xff]
    %v125 = vld [vmem:[#allocation7 + $0x180] sm:$0xff]
    %v126 = vld [vmem:[#allocation7 + $0x188] sm:$0xff]
    %v127 = vld [vmem:[#allocation7 + $0x190] sm:$0xff]
    %v128 = vld [vmem:[#allocation7 + $0x198] sm:$0xff]
    %v129 = vld [vmem:[#allocation7 + $0x1a0] sm:$0xff]
    %v130 = vld [vmem:[#allocation7 + $0x1a8] sm:$0xff]
    %v131 = vld [vmem:[#allocation7 + $0x1b0] sm:$0xff]
    %v132 = vld [vmem:[#allocation7 + $0x1b8] sm:$0xff]
    %v133 = vld [vmem:[#allocation7 + $0x1c0] sm:$0xff]
    %v134 = vld [vmem:[#allocation7 + $0x1c8] sm:$0xff]
    %v135 = vld [vmem:[#allocation7 + $0x1d0] sm:$0xff]
    %v136 = vld [vmem:[#allocation7 + $0x1d8] sm:$0xff]
    %v137 = vld [vmem:[#allocation7 + $0x1e0] sm:$0xff]
    %v138 = vld [vmem:[#allocation7 + $0x1e8] sm:$0xff]
    %v139 = vld [vmem:[#allocation7 + $0x1f0] sm:$0xff]
    %v140 = vld [vmem:[#allocation7 + $0x1f8] sm:$0xff]
    %v141 = vld [vmem:[#allocation7 + $0x200] sm:$0xff]
    %v142 = vld [vmem:[#allocation7 + $0x208] sm:$0xff]
    %v143 = vld [vmem:[#allocation7 + $0x210] sm:$0xff]
    %v144 = vld [vmem:[#allocation7 + $0x218] sm:$0xff]
    %v145 = vld [vmem:[#allocation7 + $0x220] sm:$0xff]
    %v146 = vld [vmem:[#allocation7 + $0x228] sm:$0xff]
    %v147 = vld [vmem:[#allocation7 + $0x230] sm:$0xff]
    %v148 = vld [vmem:[#allocation7 + $0x238] sm:$0xff]
    %v149 = vld [vmem:[#allocation7 + $0x240] sm:$0xff]
    %v150 = vld [vmem:[#allocation7 + $0x248] sm:$0xff]
    %v151 = vld [vmem:[#allocation7 + $0x250] sm:$0xff]
    %v152 = vld [vmem:[#allocation7 + $0x258] sm:$0xff]
    %v153 = vld [vmem:[#allocation7 + $0x260] sm:$0xff]
    %v154 = vld [vmem:[#allocation7 + $0x268] sm:$0xff]
    %v155 = vld [vmem:[#allocation7 + $0x270] sm:$0xff]
    %v156 = vld [vmem:[#allocation7 + $0x278] sm:$0xff]
    %v157 = vld [vmem:[#allocation7 + $0x280] sm:$0xff]
    %v158 = vld [vmem:[#allocation7 + $0x288] sm:$0xff]
    %v159 = vld [vmem:[#allocation7 + $0x290] sm:$0xff]
    %v160 = vld [vmem:[#allocation7 + $0x298] sm:$0xff]
    %v161 = vld [vmem:[#allocation7 + $0x2a0] sm:$0xff]
    %v162 = vld [vmem:[#allocation7 + $0x2a8] sm:$0xff]
    %v163 = vld [vmem:[#allocation7 + $0x2b0] sm:$0xff]
    %v164 = vld [vmem:[#allocation7 + $0x2b8] sm:$0xff]
    %v165 = vld [vmem:[#allocation7 + $0x2c0] sm:$0xff]
    %v166 = vld [vmem:[#allocation7 + $0x2c8] sm:$0xff]
    %v167 = vld [vmem:[#allocation7 + $0x2d0] sm:$0xff]
    %v168 = vld [vmem:[#allocation7 + $0x2d8] sm:$0xff]
    %v169 = vld [vmem:[#allocation7 + $0x2e0] sm:$0xff]
    %v170 = vld [vmem:[#allocation7 + $0x2e8] sm:$0xff]
    %v171 = vld [vmem:[#allocation7 + $0x2f0] sm:$0xff]
    %v172 = vld [vmem:[#allocation7 + $0x2f8] sm:$0xff]
    %v173 = vld [vmem:[#allocation8] sm:$0x7]
    %v175 = vperm.slane %v173, 0
    %v176 = vperm.slane %v173, 1
    %v177 = vperm.slane %v173, 2
    %181 = vmatpush.msra.mxu0 %v122
    %182 = vmatpush.msra.mxu0 %v119
    %183 = vmatpush.msra.mxu0 %v116
    %184 = vmatpush.msra.mxu0 %v113
    %185 = vmatpush.msra.mxu0 %v110
    %186 = vmatpush.msra.mxu0 %v107
    %187 = vmatpush.msra.mxu0 %v104
    %188 = vmatpush.msra.mxu0 %v101
    %189 = vmatpush.msra.mxu0 %v98
    %190 = vmatpush.msra.mxu0 %v95
    %191 = vmatpush.msra.mxu0 %v92
    %192 = vmatpush.msra.mxu0 %v89
    %193 = vmatpush.msra.mxu0 %v86
    %194 = vmatpush.msra.mxu0 %v83
    %195 = vmatpush.msra.mxu0 %v80
    %196 = vmatpush.msra.mxu0 %v77
    %197 = vmatmul.f32.gmra.mxu0 %v75
    %v198 = vpop.f32.mrf.mxu0
    %v199 = vadd.f32 %v175, %v198
    %200 = vdwg.mxu0
    %201 = vmatpush.msra.mxu0 %v170
    %202 = vmatpush.msra.mxu0 %v167
    %203 = vmatpush.msra.mxu0 %v164
    %204 = vmatpush.msra.mxu0 %v161
    %205 = vmatpush.msra.mxu0 %v158
    %206 = vmatpush.msra.mxu0 %v155
    %207 = vmatpush.msra.mxu0 %v152
    %208 = vmatpush.msra.mxu0 %v149
    %209 = vmatpush.msra.mxu0 %v146
    %210 = vmatpush.msra.mxu0 %v143
    %211 = vmatpush.msra.mxu0 %v140
    %212 = vmatpush.msra.mxu0 %v137
    %213 = vmatpush.msra.mxu0 %v134
    %214 = vmatpush.msra.mxu0 %v131
    %215 = vmatpush.msra.mxu0 %v128
    %216 = vmatpush.msra.mxu0 %v125
    %217 = vmatmul.f32.gmra.mxu0 %v76
    %v218 = vpop.f32.mrf.mxu0
    %v219 = vadd.f32 %v199, %v218
    %220 = vdwg.mxu0
    %221 = vmatpush.msra.mxu0 %v123
    %222 = vmatpush.msra.mxu0 %v120
    %223 = vmatpush.msra.mxu0 %v117
    %224 = vmatpush.msra.mxu0 %v114
    %225 = vmatpush.msra.mxu0 %v111
    %226 = vmatpush.msra.mxu0 %v108
    %227 = vmatpush.msra.mxu0 %v105
    %228 = vmatpush.msra.mxu0 %v102
    %229 = vmatpush.msra.mxu0 %v99
    %230 = vmatpush.msra.mxu0 %v96
    %231 = vmatpush.msra.mxu0 %v93
    %232 = vmatpush.msra.mxu0 %v90
    %233 = vmatpush.msra.mxu0 %v87
    %234 = vmatpush.msra.mxu0 %v84
    %235 = vmatpush.msra.mxu0 %v81
    %236 = vmatpush.msra.mxu0 %v78
    %237 = vmatmul.f32.gmra.mxu0 %v75
    %v238 = vpop.f32.mrf.mxu0
    %v239 = vadd.f32 %v176, %v238
    %240 = vdwg.mxu0
    %241 = vmatpush.msra.mxu0 %v171
    %242 = vmatpush.msra.mxu0 %v168
    %243 = vmatpush.msra.mxu0 %v165
    %244 = vmatpush.msra.mxu0 %v162
    %245 = vmatpush.msra.mxu0 %v159
    %246 = vmatpush.msra.mxu0 %v156
    %247 = vmatpush.msra.mxu0 %v153
    %248 = vmatpush.msra.mxu0 %v150
    %249 = vmatpush.msra.mxu0 %v147
    %250 = vmatpush.msra.mxu0 %v144
    %251 = vmatpush.msra.mxu0 %v141
    %252 = vmatpush.msra.mxu0 %v138
    %253 = vmatpush.msra.mxu0 %v135
    %254 = vmatpush.msra.mxu0 %v132
    %255 = vmatpush.msra.mxu0 %v129
    %256 = vmatpush.msra.mxu0 %v126
    %257 = vmatmul.f32.gmra.mxu0 %v76
    %v258 = vpop.f32.mrf.mxu0
    %v259 = vadd.f32 %v239, %v258
    %260 = vdwg.mxu0
    %261 = vmatpush.msra.mxu0 %v124
    %262 = vmatpush.msra.mxu0 %v121
    %263 = vmatpush.msra.mxu0 %v118
    %264 = vmatpush.msra.mxu0 %v115
    %265 = vmatpush.msra.mxu0 %v112
    %266 = vmatpush.msra.mxu0 %v109
    %267 = vmatpush.msra.mxu0 %v106
    %268 = vmatpush.msra.mxu0 %v103
    %269 = vmatpush.msra.mxu0 %v100
    %270 = vmatpush.msra.mxu0 %v97
    %271 = vmatpush.msra.mxu0 %v94
    %272 = vmatpush.msra.mxu0 %v91
    %273 = vmatpush.msra.mxu0 %v88
    %274 = vmatpush.msra.mxu0 %v85
    %275 = vmatpush.msra.mxu0 %v82
    %276 = vmatpush.msra.mxu0 %v79
    %277 = vmatmul.f32.gmra.mxu0 %v75
    %v278 = vpop.f32.mrf.mxu0
    %v279 = vadd.f32 %v177, %v278
    %280 = vdwg.mxu0
    %281 = vmatpush.msra.mxu0 %v172
    %282 = vmatpush.msra.mxu0 %v169
    %283 = vmatpush.msra.mxu0 %v166
    %284 = vmatpush.msra.mxu0 %v163
    %285 = vmatpush.msra.mxu0 %v160
    %286 = vmatpush.msra.mxu0 %v157
    %287 = vmatpush.msra.mxu0 %v154
    %288 = vmatpush.msra.mxu0 %v151
    %289 = vmatpush.msra.mxu0 %v148
    %290 = vmatpush.msra.mxu0 %v145
    %291 = vmatpush.msra.mxu0 %v142
    %292 = vmatpush.msra.mxu0 %v139
    %293 = vmatpush.msra.mxu0 %v136
    %294 = vmatpush.msra.mxu0 %v133
    %295 = vmatpush.msra.mxu0 %v130
    %296 = vmatpush.msra.mxu0 %v127
    %297 = vmatmul.f32.gmra.mxu0 %v76
    %v298 = vpop.f32.mrf.mxu0
    %v299 = vadd.f32 %v279, %v298
    %300 = vdwg.mxu0
    %v301 = vtanh.pop %v219
    %v302 = vtanh.pop %v259
    %v303 = vtanh.pop %v299
    %v304 = vld [vmem:[#allocation5] sm:$0xff]
    %v305 = vsub.f32 1.0, %v302
    %v306 = vmul.f32 %v305, %v303
    %v307 = vmul.f32 %v301, %v304
    %v308 = vadd.f32 %v306, %v307
    %309 = vst [vmem:[#allocation10] sm:$0xff] %v308
    // Predicated region
    $region34: #{tpu_custom_call.1} parent=1 // pred_check
      _
    $region35: #{tpu_custom_call.1} parent=1 // pred_check_branch
      %311 = sbr.rel (0) target = $region37
    $region36: #{tpu_custom_call.1} parent=1 // pred_region
      %313 = vsyncadd [#allocation4], 0
      %s315 = sshll.u32 [#allocation10], 4
      %s316 = int_to_ptr.vmem [resolvable:$true] %s315
      %s317 = sshll.u32 %s4, 4
      %s318 = int_to_ptr.hbm [resolvable:$true] %s317
      %320 = dma.vmem_to_hbm [thread:$0]  %s316, 128, %s318, [#allocation4]
    $region37: #{tpu_custom_call.1} parent=1 // pred_fallthru
      _
    // Predicated region
    $region38: #{tpu_custom_call.1} parent=1 // pred_check
      _
    $region39: #{tpu_custom_call.1} parent=1 // pred_check_branch
      %322 = sbr.rel (0) target = $region41
    $region40: #{tpu_custom_call.1} parent=1 // pred_region
      %324 = dma.done [#allocation4], 128
    $region41: #{tpu_custom_call.1} parent=1 // pred_fallthru
      _
    %325 = vsyncpa [#allocation3], 1
    %326 = vsyncpa [#allocation6], 1
    %327 = vsyncpa [#allocation9], 1
    %328 = vsyncpa [#allocation4], 1

</llo_original>
